<compile_context>
chip_gen: v7x
topology: tpu7x:2x2x1
jax: 0.10.0
libtpu: 0.0.40
codegen_flags: <defaults>
</compile_context>

<pallas_src>
import math

import jax
import jax.numpy as jnp
from jax.experimental import pallas as pl
from jax.experimental.pallas import tpu as pltpu


_NEG_BIG = -1e30  # finite "-inf" for padded vocab columns (NaN-safe)


def _round_up(x, m):
    return (x + m - 1) // m * m


def _generator_kernel(x_ref, w_ref, b_ref, o_ref, m_ref, l_ref):
    # x_ref: (TN, d_model) bf16      w_ref: (d_model, TV) bf16
    # b_ref: (1, TV) f32             o_ref: (TN, TV) out dtype
    # m_ref/l_ref: (TN, 1) f32 running max / running sum-of-exp (per row tile)
    p = pl.program_id(1)  # phase: 0 = stats sweep, 1 = write sweep
    j = pl.program_id(2)  # vocab tile index

    # bf16 MXU matmul, f32 accumulation; epilogue math in f32.
    logits = jnp.dot(x_ref[...], w_ref[...],
                     preferred_element_type=jnp.float32) + b_ref[...]

    @pl.when(p == 0)
    def _stats_sweep():
        @pl.when(j == 0)
        def _init():
            m_ref[...] = jnp.full_like(m_ref, _NEG_BIG)
            l_ref[...] = jnp.zeros_like(l_ref)

        m_prev = m_ref[...]
        m_new = jnp.maximum(m_prev, jnp.max(logits, axis=-1, keepdims=True))
        l_ref[...] = (l_ref[...] * jnp.exp(m_prev - m_new)
                      + jnp.sum(jnp.exp(logits - m_new), axis=-1, keepdims=True))
        m_ref[...] = m_new

    @pl.when(p == 1)
    def _write_sweep():
        lse = m_ref[...] + jnp.log(l_ref[...])
        o_ref[...] = (logits - lse).astype(o_ref.dtype)


def generator_forward(x, w_t, bias, *, row_tile=256, vocab_tile=2048,
                      out_dtype=None):
    """Fused linear + log_softmax.

    x:    (B, S, d_model) float array
    w_t:  (d_model, vocab) pre-transposed projection weight (ideally bf16)
    bias: (vocab,) float32
    returns (B, S, vocab) log-probabilities in `out_dtype` (default x.dtype)
    """
    B, S, d_model = x.shape
    dw, vocab = w_t.shape
    assert dw == d_model
    out_dtype = out_dtype or x.dtype

    N = B * S
    # Tile sizes clamped to the (padded) problem size, keeping (8, 128) alignment.
    tn = min(row_tile, _round_up(N, 8))
    tv = min(vocab_tile, _round_up(vocab, 128))
    n_pad = _round_up(N, tn)
    v_pad = _round_up(vocab, tv)

    x2d = x.reshape(N, d_model).astype(jnp.bfloat16)
    if n_pad != N:
        x2d = jnp.pad(x2d, ((0, n_pad - N), (0, 0)))

    w_bf16 = w_t.astype(jnp.bfloat16)
    b2d = bias.astype(jnp.float32).reshape(1, vocab)
    if v_pad != vocab:
        w_bf16 = jnp.pad(w_bf16, ((0, 0), (0, v_pad - vocab)))
        # padded columns get a huge negative bias -> exp underflows to 0,
        # never affects max; they are sliced off below anyway.
        b2d = jnp.pad(b2d, ((0, 0), (0, v_pad - vocab)),
                      constant_values=_NEG_BIG)

    n_row_tiles = n_pad // tn
    n_vocab_tiles = v_pad // tv
    out_bytes = jnp.dtype(out_dtype).itemsize

    cost = pl.CostEstimate(
        flops=2 * 2 * n_pad * d_model * v_pad,            # two vocab sweeps
        transcendentals=2 * n_pad * v_pad,
        bytes_accessed=(n_pad * d_model * 2               # x (bf16)
                        + n_row_tiles * 2 * d_model * v_pad * 2  # weight re-reads
                        + v_pad * 4                        # bias
                        + n_pad * v_pad * out_bytes),      # output writeback
    )

    # Explicit VMEM budget: double-buffered x / w / b / out tiles + tiny scratch,
    # with headroom; capped well under v7x's 64 MiB physical VMEM.
    vmem_bytes = 2 * (tn * d_model * 2 + d_model * tv * 2 + tv * 4
                      + tn * tv * out_bytes) + 4 * tn * 4
    vmem_limit = int(min(max(vmem_bytes + (4 << 20), 16 << 20), 48 << 20))

    out2d = pl.pallas_call(
        _generator_kernel,
        out_shape=jax.ShapeDtypeStruct((n_pad, v_pad), out_dtype),
        grid_spec=pltpu.PrefetchScalarGridSpec(
            num_scalar_prefetch=0,
            grid=(n_row_tiles, 2, n_vocab_tiles),
            in_specs=[
                pl.BlockSpec((tn, d_model), lambda i, p, j: (i, 0)),
                pl.BlockSpec((d_model, tv), lambda i, p, j: (0, j)),
                pl.BlockSpec((1, tv), lambda i, p, j: (0, j)),
            ],
            # During the stats sweep (p==0) the output block index is pinned to
            # (i, 0), so nothing is flushed until the write sweep (p==1) has
            # actually filled each block.
            out_specs=pl.BlockSpec((tn, tv), lambda i, p, j: (i, p * j)),
            scratch_shapes=[pltpu.VMEM((tn, 1), jnp.float32),   # running max
                            pltpu.VMEM((tn, 1), jnp.float32)],  # running sum
        ),
        compiler_params=pltpu.CompilerParams(
            dimension_semantics=("parallel", "arbitrary", "arbitrary"),
            vmem_limit_bytes=vmem_limit),
        cost_estimate=cost,
    )(x2d, w_bf16, b2d)

    return out2d[:N, :vocab].reshape(B, S, vocab)


def init_generator_params(key, d_model, vocab):
    """nn.Linear default init (uniform +/- 1/sqrt(fan_in)), PyTorch layout."""
    kw, kb = jax.random.split(key)
    bound = 1.0 / math.sqrt(d_model)
    weight = jax.random.uniform(kw, (vocab, d_model), jnp.float32,
                                minval=-bound, maxval=bound)
    bias = jax.random.uniform(kb, (vocab,), jnp.float32,
                              minval=-bound, maxval=bound)
    return weight, bias


def prepare_generator_params(weight, bias):
    """One-time conversion from nn.Linear layout (vocab, d_model) to the kernel
    layout: pre-transposed bf16 (d_model, vocab) weight + f32 bias."""
    return jnp.asarray(weight).T.astype(jnp.bfloat16), jnp.asarray(bias).astype(jnp.float32)


if __name__ == "__main__":
    key = jax.random.PRNGKey(0)
    k_x, k_p = jax.random.split(key)

    B, S, d_model, vocab = 2, 8, 32, 128
    x = jax.random.normal(k_x, (B, S, d_model), dtype=jnp.float32)
    weight, bias = init_generator_params(k_p, d_model, vocab)   # PyTorch layout
    w_t, b = prepare_generator_params(weight, bias)             # one-time transpose + bf16

    out = jax.block_until_ready(generator_forward(x, w_t, b))
    assert out.shape == (B, S, vocab)

    # Reference with matching bf16 matmul operands and f32 math.
    xr = x.reshape(-1, d_model).astype(jnp.bfloat16).astype(jnp.float32)
    logits_ref = xr @ w_t.astype(jnp.float32) + b
    ref = jax.nn.log_softmax(logits_ref, axis=-1).reshape(B, S, vocab)
    assert jnp.allclose(out, ref, atol=1e-3, rtol=1e-3), \
        float(jnp.max(jnp.abs(out - ref)))

    # Loose check against the pure-f32 PyTorch-equivalent reference.
    ref32 = jax.nn.log_softmax(x @ weight.T + bias, axis=-1)
    assert jnp.allclose(out, ref32, atol=5e-2, rtol=5e-2)

    print("KERNEL_OK")
</pallas_src>

<mosaic_0001>
module attributes {stable_mosaic.version = 11 : i64} {
  func.func @_generator_kernel(%arg0: i32, %arg1: i32, %arg2: i32, %arg3: memref<16x32xbf16, #tpu.memory_space<vmem>>, %arg4: memref<32x128xbf16, #tpu.memory_space<vmem>>, %arg5: memref<1x128xf32, #tpu.memory_space<vmem>>, %arg6: memref<16x128xf32, #tpu.memory_space<vmem>>, %arg7: memref<16x1xf32, #tpu.memory_space<vmem>>, %arg8: memref<16x1xf32, #tpu.memory_space<vmem>>) attributes {dimension_semantics = [#tpu.dimension_semantics<parallel>, #tpu.dimension_semantics<arbitrary>, #tpu.dimension_semantics<arbitrary>], iteration_bounds = array<i64: 1, 2, 1>, scalar_prefetch = 0 : i64, scratch_operands = 2 : i64, tpu.core_type = #tpu.core_type<tc>, window_params = [{transform_indices = @transform_0, window_bounds = array<i64: 16, 32>}, {transform_indices = @transform_1, window_bounds = array<i64: 32, 128>}, {transform_indices = @transform_2, window_bounds = array<i64: 1, 128>}, {transform_indices = @transform_3, window_bounds = array<i64: 16, 128>}]} {
    %c0 = arith.constant 0 : index
    %c0_0 = arith.constant 0 : index
    %0 = vector.load %arg3[%c0, %c0_0] : memref<16x32xbf16, #tpu.memory_space<vmem>>, vector<16x32xbf16>
    %c0_1 = arith.constant 0 : index
    %c0_2 = arith.constant 0 : index
    %1 = vector.load %arg4[%c0_1, %c0_2] : memref<32x128xbf16, #tpu.memory_space<vmem>>, vector<32x128xbf16>
    %cst = arith.constant dense<0.000000e+00> : vector<16x128xf32>
    %2 = tpu.matmul %0, %1, %cst {dimension_numbers = #tpu.dot_dimension_numbers<[1], [0], [0], [1], [0, 0, 1, 1], [], []>} : vector<16x32xbf16>, vector<32x128xbf16>, vector<16x128xf32> -> vector<16x128xf32>
    %c0_3 = arith.constant 0 : index
    %c0_4 = arith.constant 0 : index
    %3 = vector.load %arg5[%c0_3, %c0_4] : memref<1x128xf32, #tpu.memory_space<vmem>>, vector<1x128xf32>
    %4 = vector.broadcast %3 : vector<1x128xf32> to vector<16x128xf32>
    %5 = arith.addf %2, %4 : vector<16x128xf32>
    %c0_i32 = arith.constant 0 : i32
    %6 = arith.cmpi eq, %arg1, %c0_i32 : i32
    %7 = arith.extui %6 : i1 to i32
    %c0_i32_5 = arith.constant 0 : i32
    %8 = arith.cmpi ne, %7, %c0_i32_5 : i32
    scf.if %8 {
      %c0_i32_7 = arith.constant 0 : i32
      %12 = arith.cmpi eq, %arg2, %c0_i32_7 : i32
      %13 = arith.extui %12 : i1 to i32
      %c0_i32_8 = arith.constant 0 : i32
      %14 = arith.cmpi ne, %13, %c0_i32_8 : i32
      scf.if %14 {
        %cst_19 = arith.constant -1.000000e+30 : f32
        %31 = vector.broadcast %cst_19 : f32 to vector<16x1xf32>
        %c0_20 = arith.constant 0 : index
        %c0_21 = arith.constant 0 : index
        %32 = vector.load %arg7[%c0_20, %c0_21] : memref<16x1xf32, #tpu.memory_space<vmem>>, vector<16x1xf32>
        tpu.vector_store %arg7[%c0_20, %c0_21], %31 {strides = array<i32>} : memref<16x1xf32, #tpu.memory_space<vmem>>, vector<16x1xf32>,
        %cst_22 = arith.constant 0.000000e+00 : f32
        %33 = vector.broadcast %cst_22 : f32 to vector<16x1xf32>
        %c0_23 = arith.constant 0 : index
        %c0_24 = arith.constant 0 : index
        %34 = vector.load %arg8[%c0_23, %c0_24] : memref<16x1xf32, #tpu.memory_space<vmem>>, vector<16x1xf32>
        tpu.vector_store %arg8[%c0_23, %c0_24], %33 {strides = array<i32>} : memref<16x1xf32, #tpu.memory_space<vmem>>, vector<16x1xf32>,
      } else {
      }
      %c0_9 = arith.constant 0 : index
      %c0_10 = arith.constant 0 : index
      %15 = vector.load %arg7[%c0_9, %c0_10] : memref<16x1xf32, #tpu.memory_space<vmem>>, vector<16x1xf32>
      %cst_11 = arith.constant dense<0xFF800000> : vector<16xf32>
      %16 = vector.multi_reduction <maximumf>, %5, %cst_11 [1] : vector<16x128xf32> to vector<16xf32>
      %17 = vector.shape_cast %16 : vector<16xf32> to vector<16x1xf32>
      %18 = arith.maximumf %15, %17 : vector<16x1xf32>
      %c0_12 = arith.constant 0 : index
      %c0_13 = arith.constant 0 : index
      %19 = vector.load %arg8[%c0_12, %c0_13] : memref<16x1xf32, #tpu.memory_space<vmem>>, vector<16x1xf32>
      %20 = arith.subf %15, %18 : vector<16x1xf32>
      %21 = math.exp %20 : vector<16x1xf32>
      %22 = arith.mulf %19, %21 : vector<16x1xf32>
      %23 = vector.broadcast %18 : vector<16x1xf32> to vector<16x128xf32>
      %24 = arith.subf %5, %23 : vector<16x128xf32>
      %25 = math.exp %24 : vector<16x128xf32>
      %cst_14 = arith.constant dense<0.000000e+00> : vector<16xf32>
      %26 = vector.multi_reduction <add>, %25, %cst_14 [1] : vector<16x128xf32> to vector<16xf32>
      %27 = vector.shape_cast %26 : vector<16xf32> to vector<16x1xf32>
      %28 = arith.addf %22, %27 : vector<16x1xf32>
      %c0_15 = arith.constant 0 : index
      %c0_16 = arith.constant 0 : index
      %29 = vector.load %arg8[%c0_15, %c0_16] : memref<16x1xf32, #tpu.memory_space<vmem>>, vector<16x1xf32>
      tpu.vector_store %arg8[%c0_15, %c0_16], %28 {strides = array<i32>} : memref<16x1xf32, #tpu.memory_space<vmem>>, vector<16x1xf32>,
      %c0_17 = arith.constant 0 : index
      %c0_18 = arith.constant 0 : index
      %30 = vector.load %arg7[%c0_17, %c0_18] : memref<16x1xf32, #tpu.memory_space<vmem>>, vector<16x1xf32>
      tpu.vector_store %arg7[%c0_17, %c0_18], %18 {strides = array<i32>} : memref<16x1xf32, #tpu.memory_space<vmem>>, vector<16x1xf32>,
    } else {
    }
    %c1_i32 = arith.constant 1 : i32
    %9 = arith.cmpi eq, %arg1, %c1_i32 : i32
    %10 = arith.extui %9 : i1 to i32
    %c0_i32_6 = arith.constant 0 : i32
    %11 = arith.cmpi ne, %10, %c0_i32_6 : i32
    scf.if %11 {
      %c0_7 = arith.constant 0 : index
      %c0_8 = arith.constant 0 : index
      %12 = vector.load %arg7[%c0_7, %c0_8] : memref<16x1xf32, #tpu.memory_space<vmem>>, vector<16x1xf32>
      %c0_9 = arith.constant 0 : index
      %c0_10 = arith.constant 0 : index
      %13 = vector.load %arg8[%c0_9, %c0_10] : memref<16x1xf32, #tpu.memory_space<vmem>>, vector<16x1xf32>
      %14 = math.log %13 : vector<16x1xf32>
      %15 = arith.addf %12, %14 : vector<16x1xf32>
      %16 = vector.broadcast %15 : vector<16x1xf32> to vector<16x128xf32>
      %17 = arith.subf %5, %16 : vector<16x128xf32>
      %c0_11 = arith.constant 0 : index
      %c0_12 = arith.constant 0 : index
      %18 = vector.load %arg6[%c0_11, %c0_12] : memref<16x128xf32, #tpu.memory_space<vmem>>, vector<16x128xf32>
      tpu.vector_store %arg6[%c0_11, %c0_12], %17 {strides = array<i32>} : memref<16x128xf32, #tpu.memory_space<vmem>>, vector<16x128xf32>,
    } else {
    }
    return
  }
  func.func @transform_0(%arg0: i32, %arg1: i32, %arg2: i32) -> (i32, i32) {
    %c0_i32 = arith.constant 0 : i32
    %c0_i32_0 = arith.constant 0 : i32
    return %arg0, %c0_i32 : i32, i32
  }
  func.func @transform_1(%arg0: i32, %arg1: i32, %arg2: i32) -> (i32, i32) {
    %c0_i32 = arith.constant 0 : i32
    %c0_i32_0 = arith.constant 0 : i32
    return %c0_i32, %arg2 : i32, i32
  }
  func.func @transform_2(%arg0: i32, %arg1: i32, %arg2: i32) -> (i32, i32) {
    %c0_i32 = arith.constant 0 : i32
    %c0_i32_0 = arith.constant 0 : i32
    return %c0_i32, %arg2 : i32, i32
  }
  func.func @transform_3(%arg0: i32, %arg1: i32, %arg2: i32) -> (i32, i32) {
    %0 = arith.muli %arg1, %arg2 : i32
    %c0_i32 = arith.constant 0 : i32
    return %arg0, %0 : i32, i32
  }
}

</mosaic_0001>

<llo_original>
// kernel: tpu_custom_call.1
$region0: #{tpu_custom_call.1}
  #allocation0 [shape = 'u32[]', space=smem, size = 0x4, offset = 0x4, fixed_abs, tag = 'smem constant byte address 0x4 - core index']
  #allocation1 [shape = 'u32[144,128]{1,0:T(1,128)}', space=vmem, size = 0x12000, scoped, tag = 'internal scratch']
  #allocation2 [shape = 'f32[16,1]{1,0:T(8,128)}', space=vmem, size = 0x2000, scoped, tag = 'scratch operand']
  #allocation3 [shape = 'f32[16,1]{1,0:T(8,128)}', space=vmem, size = 0x2000, scoped, tag = 'scratch operand']
  %s0 = inlined_call_operand.hbm [shape: bf16[16,32], index: 0, kind: input, shape index: {}]
  %s1 = inlined_call_operand.hbm [shape: bf16[32,128], index: 1, kind: input, shape index: {}]
  %s2 = inlined_call_operand.vmem [shape: f32[1,128], index: 2, kind: input, shape index: {}]
  %s3 = inlined_call_operand.hbm [shape: f32[16,128], index: 3, kind: output, shape index: {}]
  %s4 = sld [smem:[#allocation0]]
  $region65: #{tpu_custom_call.1} parent=0
    _
  %s6 = ssub.s32 1, %s4
  %s7 = scalar_select 0, %s6, %s4
  $region1: #{tpu_custom_call.1} parent=0
    #allocation4 [shape = 'u8[4096]{0}', space=vmem, size = 0x1000, scoped, tag = 'input window, operand 0, single buffered']
    #allocation5 [shape = 's32[2]{0}', space=sflag, size = 0x8, scoped, tag = 'scoped memory for tpu_custom_call.1']
    #allocation6 [shape = 's32[2]{0}', space=sflag, size = 0x8, scoped, tag = 'scoped memory for tpu_custom_call.1']
    #allocation7 [shape = 'u8[8192]{0}', space=vmem, size = 0x2000, scoped, tag = 'input window, operand 1, single buffered']
    #allocation8 [shape = 's32[1]{0}', space=sflag, size = 0x4, scoped, tag = 'scoped memory for tpu_custom_call.1']
    #allocation9 [shape = 'u8[16384]{0}', space=vmem, size = 0x4000, scoped, tag = 'output window, operand 0']
    %8 = vsyncpa [#allocation5], 0
    %9 = vsyncpa [#allocation8], 0
    %10 = vsyncpa [#allocation6], 0
    %s11 = scalar_lea.sflag [#allocation6], 1
    %12 = vsyncpa %s11, 0
    loop: start=0, step=1, limit=4
    $region2: #{tpu_custom_call.1} parent=1 // loop_pre_header
      _
    $region3: #{tpu_custom_call.1} parent=1 // loop_header
      %s14 = sphi 0, %s18
      %p15 = scmp.ge.s32.totalorder %s14, 4
      %s21 = sphi 0, %s40
      %s22 = sphi 0, %s36
      %s23 = sphi 0, %s32
      %s24 = sphi 0, %s21
      %s25 = sphi 0, %s22
      %s26 = sphi 0, %s23
      %s27 = sphi 0, %s24
      %s28 = sphi 0, %s25
      %s29 = sphi 0, %s26
      %s43 = sphi 0, %s45
      %s46 = sphi 0, %s43
      %s47 = sphi 0, %s46
      %s63 = sphi 0, %s47
      %s69 = sphi 0, %s71
      %s72 = sphi 0, %s69
      %s73 = sphi 0, %s72
      %s89 = sphi 0, %s73
      %s95 = sphi 0, %s97
      %s98 = sphi 0, %s95
      %s99 = sphi 0, %s98
      %s115 = sphi 0, %s99
      %s125 = sphi 0, %s127
      %s128 = sphi 0, %s125
      %s129 = sphi 0, %s128
      %s145 = sphi 0, %s129
    $region4: #{tpu_custom_call.1} parent=1 // loop_header_branch
      %17 = sbr.rel (%p15) target = $region8
    $region5: #{tpu_custom_call.1} parent=1 // loop_body
      %s19 = ssub.s32 %s14, 1
      %s20 = ssub.s32 %s14, 2
      %s30 = sadd.s32 1, %s23
      %p31 = scmp.ge.s32.totalorder %s30, 1
      %s32 = scalar_select %p31, 0, %s30
      %s33 = sadd.s32 1, %s22
      %s34 = scalar_select %p31, %s33, %s22
      %p35 = scmp.ge.s32.totalorder %s34, 2
      %s36 = scalar_select %p35, 0, %s34
      %s37 = sadd.s32 1, %s21
      %s38 = scalar_select %p35, %s37, %s21
      %p39 = scmp.ge.s32.totalorder %s38, 1
      %s40 = scalar_select %p39, 0, %s38
      %s41 = ssub.s32 %s21, %s40
      %p42 = scmp.eq.s32.totalorder %s41, 0
      %s44 = sadd.s32 %s43, 1
      %s45 = scalar_select %p42, %s43, %s44
      %p48 = pneg %p42
      %p49 = scmp.eq.s32.totalorder %s14, 1
      %p50 = por %p48, %p49
      %p51 = scmp.ne.s32.totalorder %s43, %s46
      %p52 = scmp.eq.s32.totalorder %s14, 0
      %p53 = por %p51, %p52
      %p54 = scmp.ne.s32.totalorder %s43, %s46
      %p55 = scmp.eq.s32.totalorder %s19, 1
      %p56 = por %p54, %p55
      %p57 = scmp.ne.s32.totalorder %s46, %s47
      %p58 = scmp.eq.s32.totalorder %s19, 0
      %p59 = por %p57, %p58
      %p60 = scmp.ne.s32.totalorder %s46, %s47
      %p61 = scmp.eq.s32.totalorder %s20, 1
      %p62 = por %p60, %p61
      %p64 = scmp.ne.s32.totalorder %s47, %s63
      %p65 = scmp.eq.s32.totalorder %s20, 0
      %p66 = por %p64, %p65
      %s67 = ssub.s32 %s23, %s32
      %p68 = scmp.eq.s32.totalorder %s67, 0
      %s70 = sadd.s32 %s69, 1
      %s71 = scalar_select %p68, %s69, %s70
      %p74 = pneg %p68
      %p75 = scmp.eq.s32.totalorder %s14, 1
      %p76 = por %p74, %p75
      %p77 = scmp.ne.s32.totalorder %s69, %s72
      %p78 = scmp.eq.s32.totalorder %s14, 0
      %p79 = por %p77, %p78
      %p80 = scmp.ne.s32.totalorder %s69, %s72
      %p81 = scmp.eq.s32.totalorder %s19, 1
      %p82 = por %p80, %p81
      %p83 = scmp.ne.s32.totalorder %s72, %s73
      %p84 = scmp.eq.s32.totalorder %s19, 0
      %p85 = por %p83, %p84
      %p86 = scmp.ne.s32.totalorder %s72, %s73
      %p87 = scmp.eq.s32.totalorder %s20, 1
      %p88 = por %p86, %p87
      %p90 = scmp.ne.s32.totalorder %s73, %s89
      %p91 = scmp.eq.s32.totalorder %s20, 0
      %p92 = por %p90, %p91
      %s93 = ssub.s32 %s23, %s32
      %p94 = scmp.eq.s32.totalorder %s93, 0
      %s96 = sadd.s32 %s95, 1
      %s97 = scalar_select %p94, %s95, %s96
      %p100 = pneg %p94
      %p101 = scmp.eq.s32.totalorder %s14, 1
      %p102 = por %p100, %p101
      %p103 = scmp.ne.s32.totalorder %s95, %s98
      %p104 = scmp.eq.s32.totalorder %s14, 0
      %p105 = por %p103, %p104
      %p106 = scmp.ne.s32.totalorder %s95, %s98
      %p107 = scmp.eq.s32.totalorder %s19, 1
      %p108 = por %p106, %p107
      %p109 = scmp.ne.s32.totalorder %s98, %s99
      %p110 = scmp.eq.s32.totalorder %s19, 0
      %p111 = por %p109, %p110
      %p112 = scmp.ne.s32.totalorder %s98, %s99
      %p113 = scmp.eq.s32.totalorder %s20, 1
      %p114 = por %p112, %p113
      %p116 = scmp.ne.s32.totalorder %s99, %s115
      %p117 = scmp.eq.s32.totalorder %s20, 0
      %p118 = por %p116, %p117
      %s119 = smul.u32 %s22, %s23
      %s120 = smul.u32 %s36, %s32
      %s121 = ssub.s32 %s21, %s40
      %s122 = ssub.s32 %s119, %s120
      %s123 = sor.u32 %s121, %s122
      %p124 = scmp.eq.s32.totalorder %s123, 0
      %s126 = sadd.s32 %s125, 1
      %s127 = scalar_select %p124, %s125, %s126
      %p130 = pneg %p124
      %p131 = scmp.eq.s32.totalorder %s14, 1
      %p132 = por %p130, %p131
      %p133 = scmp.ne.s32.totalorder %s125, %s128
      %p134 = scmp.eq.s32.totalorder %s14, 0
      %p135 = por %p133, %p134
      %p136 = scmp.ne.s32.totalorder %s125, %s128
      %p137 = scmp.eq.s32.totalorder %s19, 1
      %p138 = por %p136, %p137
      %p139 = scmp.ne.s32.totalorder %s128, %s129
      %p140 = scmp.eq.s32.totalorder %s19, 0
      %p141 = por %p139, %p140
      %p142 = scmp.ne.s32.totalorder %s128, %s129
      %p143 = scmp.eq.s32.totalorder %s20, 1
      %p144 = por %p142, %p143
      %p146 = scmp.ne.s32.totalorder %s129, %s145
      %p147 = scmp.eq.s32.totalorder %s20, 0
      %p148 = por %p146, %p147
      %p149 = scmp.le.s32.totalorder 1, %s14
      %p150 = scmp.lt.s32.totalorder %s14, 3
      %p151 = pnand %p149, %p150
      %p152 = pneg %p151
      // Predicated region
      $region9: #{tpu_custom_call.1} parent=5 // pred_check
        _
      $region10: #{tpu_custom_call.1} parent=5 // pred_check_branch
        %154 = sbr.rel (%p151) target = $region12
      $region11: #{tpu_custom_call.1} parent=5 // pred_region
        %s155 = ssub.s32 %s14, 1
        // Predicated region
        $region13: #{tpu_custom_call.1} parent=11 // pred_check
          %p156 = pneg %p59
        $region14: #{tpu_custom_call.1} parent=11 // pred_check_branch
          %158 = sbr.rel (%p156) target = $region16
        $region15: #{tpu_custom_call.1} parent=11 // pred_region
          %s159 = smul.u32 2, %s24
          %s161 = ssub.s32 128, 128
          %162 = vsyncadd [#allocation5], %s161
          %s163 = smul.addr %s159, 64
          %s164 = scalar_lea.hbm %s0, %s163
          %s165 = sshll.u32 [#allocation4], 4
          %s166 = int_to_ptr.vmem [resolvable:$true] %s165
          %171 = dma.hbm_to_vmem [thread:$0]  %s164, 128, %s166, [#allocation5], 64, 64, 4
        $region16: #{tpu_custom_call.1} parent=11 // pred_fallthru
          _
        // Predicated region
        $region17: #{tpu_custom_call.1} parent=11 // pred_check
          %p172 = pneg %p85
        $region18: #{tpu_custom_call.1} parent=11 // pred_check_branch
          %174 = sbr.rel (%p172) target = $region20
        $region19: #{tpu_custom_call.1} parent=11 // pred_region
          %s176 = ssub.s32 256, 256
          %177 = vsyncadd [#allocation8], %s176
          %s178 = smul.addr %s26, 64
          %s179 = scalar_lea.hbm %s1, %s178
          %s180 = sshll.u32 [#allocation7], 4
          %s181 = int_to_ptr.vmem [resolvable:$true] %s180
          %186 = dma.hbm_to_vmem [thread:$0]  %s179, 256, %s181, [#allocation8], 64, 64, 4
        $region20: #{tpu_custom_call.1} parent=11 // pred_fallthru
          _
        // Predicated region
        $region21: #{tpu_custom_call.1} parent=11 // pred_check
          %p187 = pneg %p111
        $region22: #{tpu_custom_call.1} parent=11 // pred_check_branch
          %189 = sbr.rel (%p187) target = $region24
        $region23: #{tpu_custom_call.1} parent=11 // pred_region
          %p190 = scmp.lt.s32.totalorder %s26, 0
          %s191 = scalar_select %p190, %s26, 0
          %s192 = scalar_lea.vmem %s2, %s191
        $region24: #{tpu_custom_call.1} parent=11 // pred_fallthru
          _
      $region12: #{tpu_custom_call.1} parent=5 // pred_fallthru
        _
      %p193 = scmp.lt.s32.totalorder %s14, 2
      // Predicated region
      $region25: #{tpu_custom_call.1} parent=5 // pred_check
        %p194 = pneg %p193
      $region26: #{tpu_custom_call.1} parent=5 // pred_check_branch
        %196 = sbr.rel (%p194) target = $region28
      $region27: #{tpu_custom_call.1} parent=5 // pred_region
        _
      $region28: #{tpu_custom_call.1} parent=5 // pred_fallthru
        _
      %p197 = scmp.le.s32.totalorder 1, %s14
      %p198 = scmp.lt.s32.totalorder %s14, 3
      %p199 = pnand %p197, %p198
      %p200 = pneg %p199
      // Predicated region
      $region29: #{tpu_custom_call.1} parent=5 // pred_check
        _
      $region30: #{tpu_custom_call.1} parent=5 // pred_check_branch
        %202 = sbr.rel (%p199) target = $region32
      $region31: #{tpu_custom_call.1} parent=5 // pred_region
        %s203 = ssub.s32 %s14, 1
        // Predicated region
        $region33: #{tpu_custom_call.1} parent=31 // pred_check
          %p204 = pneg %p59
        $region34: #{tpu_custom_call.1} parent=31 // pred_check_branch
          %206 = sbr.rel (%p204) target = $region36
        $region35: #{tpu_custom_call.1} parent=31 // pred_region
          %207 = dma.done [#allocation5], 128
        $region36: #{tpu_custom_call.1} parent=31 // pred_fallthru
          _
        // Predicated region
        $region37: #{tpu_custom_call.1} parent=31 // pred_check
          %p208 = pneg %p85
        $region38: #{tpu_custom_call.1} parent=31 // pred_check_branch
          %210 = sbr.rel (%p208) target = $region40
        $region39: #{tpu_custom_call.1} parent=31 // pred_region
          %211 = dma.done [#allocation8], 256
        $region40: #{tpu_custom_call.1} parent=31 // pred_fallthru
          _
        %p212 = pneg %p59
        %p213 = pneg %p56
        %p214 = pneg %p85
        %p215 = pneg %p82
        %p216 = scmp.lt.s32.totalorder %s26, 0
        %s217 = scalar_select %p216, %s26, 0
        %s218 = scalar_lea.vmem %s2, %s217
        %p219 = pneg %p111
        %p220 = pneg %p108
        %p221 = pneg %p141
        %p222 = pneg %p138
        %s223 = sand.u32 %s128, 1
        %s224 = scalar_lea.sflag [#allocation6], %s223
        %s225 = sand.u32 %s128, 1
        %s226 = smul.addr %s225, 16
        %s227 = scalar_lea.vmem [#allocation9], %s226
        %s228 = smul.u32 2, %s24
        %p229 = scmp.lt.s32.totalorder %s26, 0
        %s230 = scalar_select %p229, %s26, 0
        %s231 = scalar_lea.vmem %s2, %s230
        %s232 = smul.u32 %s25, %s26
        %s233 = smul.u32 2, %s24
        %v235 = vld [vmem:[#allocation4] sm:$0xf]
        %v236 = vld [vmem:[#allocation4 + $0x4] sm:$0xf]
        %v237 = vld [vmem:[#allocation7] sm:$0xf]
        %v238 = vld [vmem:[#allocation7 + $0x4] sm:$0xf]
        %v239 = vld [vmem:[#allocation7 + $0x8] sm:$0xf]
        %v240 = vld [vmem:[#allocation7 + $0xc] sm:$0xf]
        %v241 = vld [vmem:[%s231] sm:$0x1]
        %v243 = vlaneseq
        %v244 = vshrl.u32 %v243, 7
        %v245 = vsub.s32 0, %v244
        %v246 = vrot.slane %v241, %v245
        %v250 = vunpack.c.l.b16 %v235
        %v251 = vunpack.c.l.b16 %v236
        %v252 = vpack.c.b16 %v251, %v250
        %v257 = vunpack.c.l.b16 %v237
        %v258 = vunpack.c.l.b16 %v238
        %v259 = vunpack.c.l.b16 %v239
        %v260 = vunpack.c.l.b16 %v240
        %v261 = vpack.c.b16 %v258, %v257
        %v262 = vpack.c.b16 %v260, %v259
        %vm265 = vcmask 261120
        %v267 = vsel %vm265, %v252, 0
        %269 = vmatprep.subr.bf16.mxu0 0
        %270 = vmatpush1.bf16.msra.mxu0 %v261
        %271 = vmatprep.subr.bf16.mxu0 0
        %272 = vmatpush1.bf16.msra.mxu0 %v262
        %273 = vmatprep.subr.bf16.mxu0 0
        %274 = vmatpush1.bf16.msra.mxu0 0
        %275 = vmatprep.subr.bf16.mxu0 0
        %276 = vmatpush1.bf16.msra.mxu0 0
        %277 = vmatprep.subr.bf16.mxu0 0
        %278 = vmatpush1.bf16.msra.mxu0 0
        %279 = vmatprep.subr.bf16.mxu0 0
        %280 = vmatpush1.bf16.msra.mxu0 0
        %281 = vmatprep.subr.bf16.mxu0 0
        %282 = vmatpush1.bf16.msra.mxu0 0
        %283 = vmatprep.subr.bf16.mxu0 0
        %284 = vmatpush1.bf16.msra.mxu0 0
        %285 = vmatprep.subr.bf16.mxu0 0
        %286 = vmatpush1.bf16.msra.mxu0 0
        %287 = vmatprep.subr.bf16.mxu0 0
        %288 = vmatpush1.bf16.msra.mxu0 0
        %289 = vmatprep.subr.bf16.mxu0 0
        %290 = vmatpush1.bf16.msra.mxu0 0
        %291 = vmatprep.subr.bf16.mxu0 0
        %292 = vmatpush1.bf16.msra.mxu0 0
        %293 = vmatprep.subr.bf16.mxu0 0
        %294 = vmatpush1.bf16.msra.mxu0 0
        %295 = vmatprep.subr.bf16.mxu0 0
        %296 = vmatpush1.bf16.msra.mxu0 0
        %297 = vmatprep.subr.bf16.mxu0 0
        %298 = vmatpush1.bf16.msra.mxu0 0
        %299 = vmatprep.subr.bf16.mxu0 0
        %300 = vmatpush1.bf16.msra.mxu0 0
        %301 = vmatprep.mubr.bf16.mxu0 0
        %302 = vmatmul.mubr.bf16.gmra.mrb[0].mxu0 %v267
        %v303 = vpop.f32.mrb[0].mxu0
        %v304 = vadd.f32 %v246, %v303
        %v305 = vpop.f32.mrb[0].mxu0
        %v306 = vpop.f32.mrb[0].mxu0
        %v307 = vadd.f32 %v246, %v306
        %v308 = vpop.f32.mrb[0].mxu0
        %309 = vdwg.mxu0
        %p310 = scmp.eq.s32.totalorder %s25, 0
        // Predicated region
        $region41: #{tpu_custom_call.1} parent=31 // pred_check
          %p311 = pneg %p310
        $region42: #{tpu_custom_call.1} parent=31 // pred_check_branch
          %313 = sbr.rel (%p311) target = $region44
        $region43: #{tpu_custom_call.1} parent=31 // pred_region
          %p314 = scmp.eq.s32.totalorder %s26, 0
          // Predicated region
          $region45: #{tpu_custom_call.1} parent=43 // pred_check
            %p315 = pneg %p314
          $region46: #{tpu_custom_call.1} parent=43 // pred_check_branch
            %317 = sbr.rel (%p315) target = $region48
          $region47: #{tpu_custom_call.1} parent=43 // pred_region
            %vm318 = vcmask 7168
            %319 = vst.msk [vmem:[#allocation2] sm:$0xff] %vm318, -1e+30
            %320 = vst.msk [vmem:[#allocation2 + $0x8] sm:$0xff] %vm318, -1e+30
            %321 = vst.msk [vmem:[#allocation3] sm:$0xff] %vm318, 0.0
            %322 = vst.msk [vmem:[#allocation3 + $0x8] sm:$0xff] %vm318, 0.0
          $region48: #{tpu_custom_call.1} parent=43 // pred_fallthru
            _
          %v323 = vld [vmem:[#allocation2] sm:$0xff]
          %v324 = vld [vmem:[#allocation2 + $0x8] sm:$0xff]
          %325 = vmax.xlane.f32.xlu0 %v304
          %v326 = vpop.xlane.xlu0 %325
          %327 = vmax.xlane.f32.xlu0 %v307
          %v328 = vpop.xlane.xlu0 %327
          %v329 = vmax.f32 %v323, %v326
          %v330 = vmax.f32 %v324, %v328
          %v331 = vld [vmem:[#allocation3] sm:$0xff]
          %v332 = vld [vmem:[#allocation3 + $0x8] sm:$0xff]
          %v333 = vsub.f32 %v323, %v329
          %v334 = vsub.f32 %v324, %v330
          %v335 = vmul.f32 %v333, 1.442695
          %v336 = vpow.pop %v335
          %v337 = vmul.f32 %v334, 1.442695
          %v338 = vpow.pop %v337
          %v339 = vmul.f32 %v331, %v336
          %v340 = vmul.f32 %v332, %v338
          %342 = vset.pattern.permute.xlu0 0
          %343 = vperm.xlu0 %342, %v329
          %v344 = vpop.permute.xlu0 %343
          %347 = vset.pattern.permute.xlu0 0
          %348 = vperm.xlu0 %347, %v330
          %v349 = vpop.permute.xlu0 %348
          %v351 = vsub.f32 %v304, %v344
          %v352 = vsub.f32 %v307, %v349
          %v353 = vmul.f32 %v351, 1.442695
          %v354 = vpow.pop %v353
          %v355 = vmul.f32 %v352, 1.442695
          %v356 = vpow.pop %v355
          %357 = vadd.xlane.f32.xlu0 %v354
          %v358 = vpop.xlane.xlu0 %357
          %359 = vadd.xlane.f32.xlu0 %v356
          %v360 = vpop.xlane.xlu0 %359
          %v361 = vadd.f32 %v339, %v358
          %v362 = vadd.f32 %v340, %v360
          %vm363 = vcmask 7168
          %364 = vst.msk [vmem:[#allocation3] sm:$0xff] %vm363, %v361
          %365 = vst.msk [vmem:[#allocation3 + $0x8] sm:$0xff] %vm363, %v362
          %366 = vst.msk [vmem:[#allocation2] sm:$0xff] %vm363, %v329
          %367 = vst.msk [vmem:[#allocation2 + $0x8] sm:$0xff] %vm363, %v330
        $region44: #{tpu_custom_call.1} parent=31 // pred_fallthru
          _
        %p368 = scmp.eq.s32.totalorder %s25, 1
        // Predicated region
        $region49: #{tpu_custom_call.1} parent=31 // pred_check
          %p369 = pneg %p368
        $region50: #{tpu_custom_call.1} parent=31 // pred_check_branch
          %371 = sbr.rel (%p369) target = $region52
        $region51: #{tpu_custom_call.1} parent=31 // pred_region
          %v372 = vld [vmem:[#allocation2] sm:$0xff]
          %v373 = vld [vmem:[#allocation2 + $0x8] sm:$0xff]
          %v374 = vld [vmem:[#allocation3] sm:$0xff]
          %v375 = vld [vmem:[#allocation3 + $0x8] sm:$0xff]
          %v376 = vlog2.pop %v374
          %v377 = vmul.f32 %v376, 0.6931472
          %v378 = vlog2.pop %v375
          %v379 = vmul.f32 %v378, 0.6931472
          %v380 = vadd.f32 %v372, %v377
          %v381 = vadd.f32 %v373, %v379
          %383 = vset.pattern.permute.xlu0 0
          %384 = vperm.xlu0 %383, %v380
          %v385 = vpop.permute.xlu0 %384
          %388 = vset.pattern.permute.xlu0 0
          %389 = vperm.xlu0 %388, %v381
          %v390 = vpop.permute.xlu0 %389
          %v392 = vsub.f32 %v304, %v385
          %v393 = vsub.f32 %v307, %v390
          %394 = vst [vmem:[%s227] sm:$0xff] %v392
          %395 = vst [vmem:[%s227 + $0x8] sm:$0xff] %v393
        $region52: #{tpu_custom_call.1} parent=31 // pred_fallthru
          _
        %s396 = sand.u32 %s128, 1
        %s397 = scalar_lea.sflag [#allocation6], %s396
        %s398 = sand.u32 %s128, 1
        %s399 = smul.addr %s398, 16
        %s400 = scalar_lea.vmem [#allocation9], %s399
        // Predicated region
        $region53: #{tpu_custom_call.1} parent=31 // pred_check
          %p401 = pneg %p138
        $region54: #{tpu_custom_call.1} parent=31 // pred_check_branch
          %403 = sbr.rel (%p401) target = $region56
        $region55: #{tpu_custom_call.1} parent=31 // pred_region
          %s404 = smul.u32 %s25, %s26
          %s405 = smul.u32 2, %s24
          %s407 = ssub.s32 256, 256
          %408 = vsyncadd %s397, %s407
          %s409 = sadd.s32 %s404, %s405
          %s410 = smul.addr %s409, 128
          %s411 = scalar_lea.hbm %s3, %s410
          %s412 = sshll.u32 %s400, 4
          %s413 = int_to_ptr.vmem [resolvable:$true] %s412
          %418 = dma.vmem_to_hbm [thread:$0]  %s413, 256, %s411, %s397, 128, 128, 8
        $region56: #{tpu_custom_call.1} parent=31 // pred_fallthru
          _
      $region32: #{tpu_custom_call.1} parent=5 // pred_fallthru
        _
      %p419 = scmp.le.s32.totalorder 2, %s14
      // Predicated region
      $region57: #{tpu_custom_call.1} parent=5 // pred_check
        %p420 = pneg %p419
      $region58: #{tpu_custom_call.1} parent=5 // pred_check_branch
        %422 = sbr.rel (%p420) target = $region60
      $region59: #{tpu_custom_call.1} parent=5 // pred_region
        %s423 = ssub.s32 %s14, 2
        // Predicated region
        $region61: #{tpu_custom_call.1} parent=59 // pred_check
          %p424 = pneg %p144
        $region62: #{tpu_custom_call.1} parent=59 // pred_check_branch
          %426 = sbr.rel (%p424) target = $region64
        $region63: #{tpu_custom_call.1} parent=59 // pred_region
          %s427 = sand.u32 %s129, 1
          %s428 = scalar_lea.sflag [#allocation6], %s427
          %s429 = sand.u32 %s129, 1
          %s430 = smul.addr %s429, 16
          %s431 = scalar_lea.vmem [#allocation9], %s430
          %432 = dma.done %s428, 256
        $region64: #{tpu_custom_call.1} parent=59 // pred_fallthru
          _
      $region60: #{tpu_custom_call.1} parent=5 // pred_fallthru
        _
    $region6: #{tpu_custom_call.1} parent=1 // loop_footer
      %s18 = sadd.s32 1, %s14
    $region7: #{tpu_custom_call.1} parent=1 // loop_footer_branch
      %13 = sbr.rel target = $region3
    $region8: #{tpu_custom_call.1} parent=1 // loop_exit
      _
    %433 = vsyncpa [#allocation5], 1
    %s434 = scalar_lea.sflag [#allocation5], 1
    %435 = vsyncpa %s434, 1
    %436 = vsyncpa [#allocation8], 1
    %437 = vsyncpa [#allocation6], 1
    %s438 = scalar_lea.sflag [#allocation6], 1
    %439 = vsyncpa %s438, 1

</llo_original>
